<compile_context>
chip_gen: v7x
topology: tpu7x:2x2x1
jax: 0.10.0
libtpu: 0.0.40
codegen_flags: <defaults>
</compile_context>

<pallas_src>
import numpy as np
import jax
import jax.numpy as jnp
from jax.experimental import pallas as pl
from jax.experimental.pallas import tpu as pltpu


# --------------------------- packed-parameter layout -------------------------
def _param_layout(D):
    """8-sublane-aligned row offsets for [w1 | b1 | w2 | b2] in one (total, D) slab."""
    rup = lambda x: (x + 7) // 8 * 8
    o_w1 = 0
    o_b1 = rup(D)
    o_w2 = o_b1 + 8
    o_b2 = o_w2 + rup(D)
    total = o_b2 + 8
    return o_w1, o_b1, o_w2, o_b2, total


def pack_params(w1, b1, w2, b2):
    D = w1.shape[0]
    o_w1, o_b1, o_w2, o_b2, total = _param_layout(D)
    params = jnp.zeros((total, D), jnp.float32)
    params = params.at[o_w1:o_w1 + D, :].set(w1)
    params = params.at[o_b1:o_b1 + 1, :].set(b1.reshape(1, D))
    params = params.at[o_w2:o_w2 + D, :].set(w2)
    params = params.at[o_b2:o_b2 + 1, :].set(b2.reshape(1, D))
    return params


# ----------------------------- Pallas kernel --------------------------------
def _timestep_embed_kernel(ts_ref, pe_hbm, params_ref, o_ref, x_scratch, sem):
    # ts_ref    : SMEM (B,) int32          (scalar-prefetch operand)
    # pe_hbm    : HBM  (L, D) f32          (memory_space=pl.ANY; NOT auto-DMA'd)
    # params_ref: VMEM (P, D) f32          (packed w1|b1|w2|b2)
    # o_ref     : VMEM (B, D) f32
    # x_scratch : VMEM (B, D) f32 ; sem : DMA semaphores (B,)
    B, D = o_ref.shape
    o_w1, o_b1, o_w2, o_b2, _ = _param_layout(D)

    # 1) Gather the B PE rows straight from HBM: B tiny overlapped DMAs (~128 B each).
    #    Read every SMEM scalar and issue every start BEFORE the first wait.
    copies = []
    for b in range(B):
        cp = pltpu.make_async_copy(
            pe_hbm.at[pl.ds(ts_ref[b], 1), :],      # (1, D) dynamic row in HBM
            x_scratch.at[pl.ds(b, 1), :],           # (1, D) row in VMEM scratch
            sem.at[b],
        )
        cp.start()
        copies.append(cp)
    for cp in copies:
        cp.wait()

    # 2) 2-layer SiLU MLP on the gathered rows (single MXU-tile matmuls, f32).
    w1 = params_ref[o_w1:o_w1 + D, :]
    b1 = params_ref[o_b1:o_b1 + 1, :]
    w2 = params_ref[o_w2:o_w2 + D, :]
    b2 = params_ref[o_b2:o_b2 + 1, :]

    x = x_scratch[...]
    h = jnp.dot(x, w1, preferred_element_type=jnp.float32) + b1
    h = h * jax.nn.sigmoid(h)                       # SiLU (EUP sigmoid + VPU mul)
    y = jnp.dot(h, w2, preferred_element_type=jnp.float32) + b2
    o_ref[...] = y.astype(o_ref.dtype)


def time_embed_pallas(timesteps, pe2d, params):
    """timesteps: (B,) int32 ; pe2d: (L, D) f32 ; params: (P, D) f32 -> (B, D) f32."""
    B = int(timesteps.shape[0])
    L, D = pe2d.shape
    P = int(params.shape[0])

    cost = pl.CostEstimate(
        flops=2 * (2 * B * D * D) + 3 * B * D,        # two matmuls + bias/SiLU mul
        transcendentals=B * D,                        # sigmoid
        bytes_accessed=int(P * D * 4 + B * D * 4 * 2 + B * 4),
    )

    # grid=() -> every index_map receives only the scalar-prefetch ref.
    return pl.pallas_call(
        _timestep_embed_kernel,
        out_shape=jax.ShapeDtypeStruct((B, D), jnp.float32),
        grid_spec=pltpu.PrefetchScalarGridSpec(
            num_scalar_prefetch=1,                    # timesteps -> SMEM
            grid=(),                                  # single invocation: overhead-bound op
            in_specs=[
                pl.BlockSpec(memory_space=pl.ANY),    # pe table stays in HBM (manual gather)
                pl.BlockSpec((P, D), lambda ts: (0, 0)),   # packed params (one DMA)
            ],
            out_specs=pl.BlockSpec((B, D), lambda ts: (0, 0)),
            scratch_shapes=[
                pltpu.VMEM((B, D), jnp.float32),      # gathered rows
                pltpu.SemaphoreType.DMA((B,)),        # one sem per row DMA
            ],
        ),
        cost_estimate=cost,
    )(timesteps, pe2d, params)


# --------------------------- parameter / buffer setup -----------------------
def make_pe_table(d_model, max_len=5000):
    """Sinusoidal positional-encoding buffer, shape (max_len, 1, d_model)."""
    position = jnp.arange(max_len, dtype=jnp.float32)[:, None]            # (L, 1)
    div_term = jnp.exp(
        jnp.arange(0, d_model, 2, dtype=jnp.float32) * (-np.log(10000.0) / d_model)
    )                                                                      # (D/2,)
    pe = jnp.zeros((max_len, d_model), dtype=jnp.float32)
    pe = pe.at[:, 0::2].set(jnp.sin(position * div_term))
    pe = pe.at[:, 1::2].set(jnp.cos(position * div_term))
    return pe[:, None, :]                                                  # (L, 1, D)


def init_params(key, d):
    """Deterministic init matching nn.Linear(d, d) shapes (stored as (in, out))."""
    k1, k2, k3, k4 = jax.random.split(key, 4)
    bound = 1.0 / np.sqrt(d)
    w1 = jax.random.uniform(k1, (d, d), jnp.float32, -bound, bound)
    b1 = jax.random.uniform(k2, (1, d), jnp.float32, -bound, bound)
    w2 = jax.random.uniform(k3, (d, d), jnp.float32, -bound, bound)
    b2 = jax.random.uniform(k4, (1, d), jnp.float32, -bound, bound)
    return w1, b1, w2, b2


def timestep_embedder_forward(timesteps, pe, w1, b1, w2, b2):
    """timesteps: (B,) int ; pe: (L, 1, D) -> (B, 1, D) f32 (row gather fused in-kernel)."""
    L, _, D = pe.shape
    B = timesteps.shape[0]
    pe2d = pe.reshape(L, D)                                # squeeze singleton axis
    params = pack_params(w1, b1, w2, b2)                   # one contiguous VMEM slab
    ts = jnp.clip(timesteps, 0, L - 1).astype(jnp.int32)   # no runtime OOB check on refs
    y = time_embed_pallas(ts, pe2d, params)
    return y.reshape(B, 1, D)


# ----------------------------------- main ------------------------------------
if __name__ == "__main__":
    cond_emb_size = 32      # D
    batch = 8               # B
    max_len = 5000

    key = jax.random.PRNGKey(0)
    k_param, k_ts = jax.random.split(key)

    pe = make_pe_table(cond_emb_size, max_len)
    w1, b1, w2, b2 = init_params(k_param, cond_emb_size)
    timesteps = jax.random.randint(k_ts, (batch,), 0, max_len, dtype=jnp.int32)

    out = timestep_embedder_forward(timesteps, pe, w1, b1, w2, b2)
    out = jax.block_until_ready(out)

    # pure-JAX reference of the full forward (exact-table gather + MLP)
    x_ref = pe[timesteps].reshape(batch, cond_emb_size)
    h_ref = x_ref @ w1 + b1
    h_ref = h_ref * jax.nn.sigmoid(h_ref)
    y_ref = (h_ref @ w2 + b2).reshape(batch, 1, cond_emb_size)
    np.testing.assert_allclose(np.asarray(out), np.asarray(y_ref), rtol=1e-5, atol=1e-5)

    assert out.shape == (batch, 1, cond_emb_size)
    print("KERNEL_OK")
</pallas_src>

<mosaic_0001>
module attributes {stable_mosaic.version = 11 : i64} {
  func.func @_timestep_embed_kernel(%arg0: memref<8xi32, #tpu.memory_space<smem>>, %arg1: memref<5000x32xf32, #tpu.memory_space<any>>, %arg2: memref<80x32xf32, #tpu.memory_space<vmem>>, %arg3: memref<8x32xf32, #tpu.memory_space<vmem>>, %arg4: memref<8x32xf32, #tpu.memory_space<vmem>>, %arg5: memref<8x!tpu.dma_semaphore, #tpu.memory_space<semaphore_mem>>) attributes {dimension_semantics = [], scalar_prefetch = 1 : i64, scratch_operands = 2 : i64, tpu.core_type = #tpu.core_type<tc>} {
    %c0 = arith.constant 0 : index
    %0 = memref.load %arg0[%c0] : memref<8xi32, #tpu.memory_space<smem>>
    %c0_i32 = arith.constant 0 : i32
    %c0_i32_0 = arith.constant 0 : i32
    %1 = tpu.memref_slice %arg1[%0, %c0_i32_0] : memref<5000x32xf32, #tpu.memory_space<any>> -> memref<1x32xf32, #tpu.memory_space<any>>
    %c0_i32_1 = arith.constant 0 : i32
    %c0_i32_2 = arith.constant 0 : i32
    %2 = tpu.memref_slice %arg4[%c0_i32_1, %c0_i32_2] : memref<8x32xf32, #tpu.memory_space<vmem>> -> memref<1x32xf32, #tpu.memory_space<vmem>>
    %3 = tpu.memref_slice %arg5[%c0_i32] : memref<8x!tpu.dma_semaphore, #tpu.memory_space<semaphore_mem>> -> memref<1x!tpu.dma_semaphore, #tpu.memory_space<semaphore_mem>>
    %4 = tpu.memref_squeeze %3 : memref<1x!tpu.dma_semaphore, #tpu.memory_space<semaphore_mem>> -> memref<!tpu.dma_semaphore, #tpu.memory_space<semaphore_mem>>
    tpu.enqueue_dma source(%1 : memref<1x32xf32, #tpu.memory_space<any>>) target(%2 : memref<1x32xf32, #tpu.memory_space<vmem>>) target_semaphore(%4 : memref<!tpu.dma_semaphore, #tpu.memory_space<semaphore_mem>>)
    %c1 = arith.constant 1 : index
    %5 = memref.load %arg0[%c1] : memref<8xi32, #tpu.memory_space<smem>>
    %c1_i32 = arith.constant 1 : i32
    %c0_i32_3 = arith.constant 0 : i32
    %6 = tpu.memref_slice %arg1[%5, %c0_i32_3] : memref<5000x32xf32, #tpu.memory_space<any>> -> memref<1x32xf32, #tpu.memory_space<any>>
    %c1_i32_4 = arith.constant 1 : i32
    %c0_i32_5 = arith.constant 0 : i32
    %7 = tpu.memref_slice %arg4[%c1_i32_4, %c0_i32_5] : memref<8x32xf32, #tpu.memory_space<vmem>> -> memref<1x32xf32, #tpu.memory_space<vmem>>
    %8 = tpu.memref_slice %arg5[%c1_i32] : memref<8x!tpu.dma_semaphore, #tpu.memory_space<semaphore_mem>> -> memref<1x!tpu.dma_semaphore, #tpu.memory_space<semaphore_mem>>
    %9 = tpu.memref_squeeze %8 : memref<1x!tpu.dma_semaphore, #tpu.memory_space<semaphore_mem>> -> memref<!tpu.dma_semaphore, #tpu.memory_space<semaphore_mem>>
    tpu.enqueue_dma source(%6 : memref<1x32xf32, #tpu.memory_space<any>>) target(%7 : memref<1x32xf32, #tpu.memory_space<vmem>>) target_semaphore(%9 : memref<!tpu.dma_semaphore, #tpu.memory_space<semaphore_mem>>)
    %c2 = arith.constant 2 : index
    %10 = memref.load %arg0[%c2] : memref<8xi32, #tpu.memory_space<smem>>
    %c2_i32 = arith.constant 2 : i32
    %c0_i32_6 = arith.constant 0 : i32
    %11 = tpu.memref_slice %arg1[%10, %c0_i32_6] : memref<5000x32xf32, #tpu.memory_space<any>> -> memref<1x32xf32, #tpu.memory_space<any>>
    %c2_i32_7 = arith.constant 2 : i32
    %c0_i32_8 = arith.constant 0 : i32
    %12 = tpu.memref_slice %arg4[%c2_i32_7, %c0_i32_8] : memref<8x32xf32, #tpu.memory_space<vmem>> -> memref<1x32xf32, #tpu.memory_space<vmem>>
    %13 = tpu.memref_slice %arg5[%c2_i32] : memref<8x!tpu.dma_semaphore, #tpu.memory_space<semaphore_mem>> -> memref<1x!tpu.dma_semaphore, #tpu.memory_space<semaphore_mem>>
    %14 = tpu.memref_squeeze %13 : memref<1x!tpu.dma_semaphore, #tpu.memory_space<semaphore_mem>> -> memref<!tpu.dma_semaphore, #tpu.memory_space<semaphore_mem>>
    tpu.enqueue_dma source(%11 : memref<1x32xf32, #tpu.memory_space<any>>) target(%12 : memref<1x32xf32, #tpu.memory_space<vmem>>) target_semaphore(%14 : memref<!tpu.dma_semaphore, #tpu.memory_space<semaphore_mem>>)
    %c3 = arith.constant 3 : index
    %15 = memref.load %arg0[%c3] : memref<8xi32, #tpu.memory_space<smem>>
    %c3_i32 = arith.constant 3 : i32
    %c0_i32_9 = arith.constant 0 : i32
    %16 = tpu.memref_slice %arg1[%15, %c0_i32_9] : memref<5000x32xf32, #tpu.memory_space<any>> -> memref<1x32xf32, #tpu.memory_space<any>>
    %c3_i32_10 = arith.constant 3 : i32
    %c0_i32_11 = arith.constant 0 : i32
    %17 = tpu.memref_slice %arg4[%c3_i32_10, %c0_i32_11] : memref<8x32xf32, #tpu.memory_space<vmem>> -> memref<1x32xf32, #tpu.memory_space<vmem>>
    %18 = tpu.memref_slice %arg5[%c3_i32] : memref<8x!tpu.dma_semaphore, #tpu.memory_space<semaphore_mem>> -> memref<1x!tpu.dma_semaphore, #tpu.memory_space<semaphore_mem>>
    %19 = tpu.memref_squeeze %18 : memref<1x!tpu.dma_semaphore, #tpu.memory_space<semaphore_mem>> -> memref<!tpu.dma_semaphore, #tpu.memory_space<semaphore_mem>>
    tpu.enqueue_dma source(%16 : memref<1x32xf32, #tpu.memory_space<any>>) target(%17 : memref<1x32xf32, #tpu.memory_space<vmem>>) target_semaphore(%19 : memref<!tpu.dma_semaphore, #tpu.memory_space<semaphore_mem>>)
    %c4 = arith.constant 4 : index
    %20 = memref.load %arg0[%c4] : memref<8xi32, #tpu.memory_space<smem>>
    %c4_i32 = arith.constant 4 : i32
    %c0_i32_12 = arith.constant 0 : i32
    %21 = tpu.memref_slice %arg1[%20, %c0_i32_12] : memref<5000x32xf32, #tpu.memory_space<any>> -> memref<1x32xf32, #tpu.memory_space<any>>
    %c4_i32_13 = arith.constant 4 : i32
    %c0_i32_14 = arith.constant 0 : i32
    %22 = tpu.memref_slice %arg4[%c4_i32_13, %c0_i32_14] : memref<8x32xf32, #tpu.memory_space<vmem>> -> memref<1x32xf32, #tpu.memory_space<vmem>>
    %23 = tpu.memref_slice %arg5[%c4_i32] : memref<8x!tpu.dma_semaphore, #tpu.memory_space<semaphore_mem>> -> memref<1x!tpu.dma_semaphore, #tpu.memory_space<semaphore_mem>>
    %24 = tpu.memref_squeeze %23 : memref<1x!tpu.dma_semaphore, #tpu.memory_space<semaphore_mem>> -> memref<!tpu.dma_semaphore, #tpu.memory_space<semaphore_mem>>
    tpu.enqueue_dma source(%21 : memref<1x32xf32, #tpu.memory_space<any>>) target(%22 : memref<1x32xf32, #tpu.memory_space<vmem>>) target_semaphore(%24 : memref<!tpu.dma_semaphore, #tpu.memory_space<semaphore_mem>>)
    %c5 = arith.constant 5 : index
    %25 = memref.load %arg0[%c5] : memref<8xi32, #tpu.memory_space<smem>>
    %c5_i32 = arith.constant 5 : i32
    %c0_i32_15 = arith.constant 0 : i32
    %26 = tpu.memref_slice %arg1[%25, %c0_i32_15] : memref<5000x32xf32, #tpu.memory_space<any>> -> memref<1x32xf32, #tpu.memory_space<any>>
    %c5_i32_16 = arith.constant 5 : i32
    %c0_i32_17 = arith.constant 0 : i32
    %27 = tpu.memref_slice %arg4[%c5_i32_16, %c0_i32_17] : memref<8x32xf32, #tpu.memory_space<vmem>> -> memref<1x32xf32, #tpu.memory_space<vmem>>
    %28 = tpu.memref_slice %arg5[%c5_i32] : memref<8x!tpu.dma_semaphore, #tpu.memory_space<semaphore_mem>> -> memref<1x!tpu.dma_semaphore, #tpu.memory_space<semaphore_mem>>
    %29 = tpu.memref_squeeze %28 : memref<1x!tpu.dma_semaphore, #tpu.memory_space<semaphore_mem>> -> memref<!tpu.dma_semaphore, #tpu.memory_space<semaphore_mem>>
    tpu.enqueue_dma source(%26 : memref<1x32xf32, #tpu.memory_space<any>>) target(%27 : memref<1x32xf32, #tpu.memory_space<vmem>>) target_semaphore(%29 : memref<!tpu.dma_semaphore, #tpu.memory_space<semaphore_mem>>)
    %c6 = arith.constant 6 : index
    %30 = memref.load %arg0[%c6] : memref<8xi32, #tpu.memory_space<smem>>
    %c6_i32 = arith.constant 6 : i32
    %c0_i32_18 = arith.constant 0 : i32
    %31 = tpu.memref_slice %arg1[%30, %c0_i32_18] : memref<5000x32xf32, #tpu.memory_space<any>> -> memref<1x32xf32, #tpu.memory_space<any>>
    %c6_i32_19 = arith.constant 6 : i32
    %c0_i32_20 = arith.constant 0 : i32
    %32 = tpu.memref_slice %arg4[%c6_i32_19, %c0_i32_20] : memref<8x32xf32, #tpu.memory_space<vmem>> -> memref<1x32xf32, #tpu.memory_space<vmem>>
    %33 = tpu.memref_slice %arg5[%c6_i32] : memref<8x!tpu.dma_semaphore, #tpu.memory_space<semaphore_mem>> -> memref<1x!tpu.dma_semaphore, #tpu.memory_space<semaphore_mem>>
    %34 = tpu.memref_squeeze %33 : memref<1x!tpu.dma_semaphore, #tpu.memory_space<semaphore_mem>> -> memref<!tpu.dma_semaphore, #tpu.memory_space<semaphore_mem>>
    tpu.enqueue_dma source(%31 : memref<1x32xf32, #tpu.memory_space<any>>) target(%32 : memref<1x32xf32, #tpu.memory_space<vmem>>) target_semaphore(%34 : memref<!tpu.dma_semaphore, #tpu.memory_space<semaphore_mem>>)
    %c7 = arith.constant 7 : index
    %35 = memref.load %arg0[%c7] : memref<8xi32, #tpu.memory_space<smem>>
    %c7_i32 = arith.constant 7 : i32
    %c0_i32_21 = arith.constant 0 : i32
    %36 = tpu.memref_slice %arg1[%35, %c0_i32_21] : memref<5000x32xf32, #tpu.memory_space<any>> -> memref<1x32xf32, #tpu.memory_space<any>>
    %c7_i32_22 = arith.constant 7 : i32
    %c0_i32_23 = arith.constant 0 : i32
    %37 = tpu.memref_slice %arg4[%c7_i32_22, %c0_i32_23] : memref<8x32xf32, #tpu.memory_space<vmem>> -> memref<1x32xf32, #tpu.memory_space<vmem>>
    %38 = tpu.memref_slice %arg5[%c7_i32] : memref<8x!tpu.dma_semaphore, #tpu.memory_space<semaphore_mem>> -> memref<1x!tpu.dma_semaphore, #tpu.memory_space<semaphore_mem>>
    %39 = tpu.memref_squeeze %38 : memref<1x!tpu.dma_semaphore, #tpu.memory_space<semaphore_mem>> -> memref<!tpu.dma_semaphore, #tpu.memory_space<semaphore_mem>>
    tpu.enqueue_dma source(%36 : memref<1x32xf32, #tpu.memory_space<any>>) target(%37 : memref<1x32xf32, #tpu.memory_space<vmem>>) target_semaphore(%39 : memref<!tpu.dma_semaphore, #tpu.memory_space<semaphore_mem>>)
    %c0_i32_24 = arith.constant 0 : i32
    %c0_i32_25 = arith.constant 0 : i32
    %40 = tpu.memref_slice %arg1[%0, %c0_i32_25] : memref<5000x32xf32, #tpu.memory_space<any>> -> memref<1x32xf32, #tpu.memory_space<any>>
    %c0_i32_26 = arith.constant 0 : i32
    %c0_i32_27 = arith.constant 0 : i32
    %41 = tpu.memref_slice %arg4[%c0_i32_26, %c0_i32_27] : memref<8x32xf32, #tpu.memory_space<vmem>> -> memref<1x32xf32, #tpu.memory_space<vmem>>
    %42 = tpu.memref_slice %arg5[%c0_i32_24] : memref<8x!tpu.dma_semaphore, #tpu.memory_space<semaphore_mem>> -> memref<1x!tpu.dma_semaphore, #tpu.memory_space<semaphore_mem>>
    %43 = tpu.memref_squeeze %42 : memref<1x!tpu.dma_semaphore, #tpu.memory_space<semaphore_mem>> -> memref<!tpu.dma_semaphore, #tpu.memory_space<semaphore_mem>>
    tpu.wait_dma2 semaphore(%43 : memref<!tpu.dma_semaphore, #tpu.memory_space<semaphore_mem>>) src(%40 : memref<1x32xf32, #tpu.memory_space<any>>) dst(%41 : memref<1x32xf32, #tpu.memory_space<vmem>>)
    %c1_i32_28 = arith.constant 1 : i32
    %c0_i32_29 = arith.constant 0 : i32
    %44 = tpu.memref_slice %arg1[%5, %c0_i32_29] : memref<5000x32xf32, #tpu.memory_space<any>> -> memref<1x32xf32, #tpu.memory_space<any>>
    %c1_i32_30 = arith.constant 1 : i32
    %c0_i32_31 = arith.constant 0 : i32
    %45 = tpu.memref_slice %arg4[%c1_i32_30, %c0_i32_31] : memref<8x32xf32, #tpu.memory_space<vmem>> -> memref<1x32xf32, #tpu.memory_space<vmem>>
    %46 = tpu.memref_slice %arg5[%c1_i32_28] : memref<8x!tpu.dma_semaphore, #tpu.memory_space<semaphore_mem>> -> memref<1x!tpu.dma_semaphore, #tpu.memory_space<semaphore_mem>>
    %47 = tpu.memref_squeeze %46 : memref<1x!tpu.dma_semaphore, #tpu.memory_space<semaphore_mem>> -> memref<!tpu.dma_semaphore, #tpu.memory_space<semaphore_mem>>
    tpu.wait_dma2 semaphore(%47 : memref<!tpu.dma_semaphore, #tpu.memory_space<semaphore_mem>>) src(%44 : memref<1x32xf32, #tpu.memory_space<any>>) dst(%45 : memref<1x32xf32, #tpu.memory_space<vmem>>)
    %c2_i32_32 = arith.constant 2 : i32
    %c0_i32_33 = arith.constant 0 : i32
    %48 = tpu.memref_slice %arg1[%10, %c0_i32_33] : memref<5000x32xf32, #tpu.memory_space<any>> -> memref<1x32xf32, #tpu.memory_space<any>>
    %c2_i32_34 = arith.constant 2 : i32
    %c0_i32_35 = arith.constant 0 : i32
    %49 = tpu.memref_slice %arg4[%c2_i32_34, %c0_i32_35] : memref<8x32xf32, #tpu.memory_space<vmem>> -> memref<1x32xf32, #tpu.memory_space<vmem>>
    %50 = tpu.memref_slice %arg5[%c2_i32_32] : memref<8x!tpu.dma_semaphore, #tpu.memory_space<semaphore_mem>> -> memref<1x!tpu.dma_semaphore, #tpu.memory_space<semaphore_mem>>
    %51 = tpu.memref_squeeze %50 : memref<1x!tpu.dma_semaphore, #tpu.memory_space<semaphore_mem>> -> memref<!tpu.dma_semaphore, #tpu.memory_space<semaphore_mem>>
    tpu.wait_dma2 semaphore(%51 : memref<!tpu.dma_semaphore, #tpu.memory_space<semaphore_mem>>) src(%48 : memref<1x32xf32, #tpu.memory_space<any>>) dst(%49 : memref<1x32xf32, #tpu.memory_space<vmem>>)
    %c3_i32_36 = arith.constant 3 : i32
    %c0_i32_37 = arith.constant 0 : i32
    %52 = tpu.memref_slice %arg1[%15, %c0_i32_37] : memref<5000x32xf32, #tpu.memory_space<any>> -> memref<1x32xf32, #tpu.memory_space<any>>
    %c3_i32_38 = arith.constant 3 : i32
    %c0_i32_39 = arith.constant 0 : i32
    %53 = tpu.memref_slice %arg4[%c3_i32_38, %c0_i32_39] : memref<8x32xf32, #tpu.memory_space<vmem>> -> memref<1x32xf32, #tpu.memory_space<vmem>>
    %54 = tpu.memref_slice %arg5[%c3_i32_36] : memref<8x!tpu.dma_semaphore, #tpu.memory_space<semaphore_mem>> -> memref<1x!tpu.dma_semaphore, #tpu.memory_space<semaphore_mem>>
    %55 = tpu.memref_squeeze %54 : memref<1x!tpu.dma_semaphore, #tpu.memory_space<semaphore_mem>> -> memref<!tpu.dma_semaphore, #tpu.memory_space<semaphore_mem>>
    tpu.wait_dma2 semaphore(%55 : memref<!tpu.dma_semaphore, #tpu.memory_space<semaphore_mem>>) src(%52 : memref<1x32xf32, #tpu.memory_space<any>>) dst(%53 : memref<1x32xf32, #tpu.memory_space<vmem>>)
    %c4_i32_40 = arith.constant 4 : i32
    %c0_i32_41 = arith.constant 0 : i32
    %56 = tpu.memref_slice %arg1[%20, %c0_i32_41] : memref<5000x32xf32, #tpu.memory_space<any>> -> memref<1x32xf32, #tpu.memory_space<any>>
    %c4_i32_42 = arith.constant 4 : i32
    %c0_i32_43 = arith.constant 0 : i32
    %57 = tpu.memref_slice %arg4[%c4_i32_42, %c0_i32_43] : memref<8x32xf32, #tpu.memory_space<vmem>> -> memref<1x32xf32, #tpu.memory_space<vmem>>
    %58 = tpu.memref_slice %arg5[%c4_i32_40] : memref<8x!tpu.dma_semaphore, #tpu.memory_space<semaphore_mem>> -> memref<1x!tpu.dma_semaphore, #tpu.memory_space<semaphore_mem>>
    %59 = tpu.memref_squeeze %58 : memref<1x!tpu.dma_semaphore, #tpu.memory_space<semaphore_mem>> -> memref<!tpu.dma_semaphore, #tpu.memory_space<semaphore_mem>>
    tpu.wait_dma2 semaphore(%59 : memref<!tpu.dma_semaphore, #tpu.memory_space<semaphore_mem>>) src(%56 : memref<1x32xf32, #tpu.memory_space<any>>) dst(%57 : memref<1x32xf32, #tpu.memory_space<vmem>>)
    %c5_i32_44 = arith.constant 5 : i32
    %c0_i32_45 = arith.constant 0 : i32
    %60 = tpu.memref_slice %arg1[%25, %c0_i32_45] : memref<5000x32xf32, #tpu.memory_space<any>> -> memref<1x32xf32, #tpu.memory_space<any>>
    %c5_i32_46 = arith.constant 5 : i32
    %c0_i32_47 = arith.constant 0 : i32
    %61 = tpu.memref_slice %arg4[%c5_i32_46, %c0_i32_47] : memref<8x32xf32, #tpu.memory_space<vmem>> -> memref<1x32xf32, #tpu.memory_space<vmem>>
    %62 = tpu.memref_slice %arg5[%c5_i32_44] : memref<8x!tpu.dma_semaphore, #tpu.memory_space<semaphore_mem>> -> memref<1x!tpu.dma_semaphore, #tpu.memory_space<semaphore_mem>>
    %63 = tpu.memref_squeeze %62 : memref<1x!tpu.dma_semaphore, #tpu.memory_space<semaphore_mem>> -> memref<!tpu.dma_semaphore, #tpu.memory_space<semaphore_mem>>
    tpu.wait_dma2 semaphore(%63 : memref<!tpu.dma_semaphore, #tpu.memory_space<semaphore_mem>>) src(%60 : memref<1x32xf32, #tpu.memory_space<any>>) dst(%61 : memref<1x32xf32, #tpu.memory_space<vmem>>)
    %c6_i32_48 = arith.constant 6 : i32
    %c0_i32_49 = arith.constant 0 : i32
    %64 = tpu.memref_slice %arg1[%30, %c0_i32_49] : memref<5000x32xf32, #tpu.memory_space<any>> -> memref<1x32xf32, #tpu.memory_space<any>>
    %c6_i32_50 = arith.constant 6 : i32
    %c0_i32_51 = arith.constant 0 : i32
    %65 = tpu.memref_slice %arg4[%c6_i32_50, %c0_i32_51] : memref<8x32xf32, #tpu.memory_space<vmem>> -> memref<1x32xf32, #tpu.memory_space<vmem>>
    %66 = tpu.memref_slice %arg5[%c6_i32_48] : memref<8x!tpu.dma_semaphore, #tpu.memory_space<semaphore_mem>> -> memref<1x!tpu.dma_semaphore, #tpu.memory_space<semaphore_mem>>
    %67 = tpu.memref_squeeze %66 : memref<1x!tpu.dma_semaphore, #tpu.memory_space<semaphore_mem>> -> memref<!tpu.dma_semaphore, #tpu.memory_space<semaphore_mem>>
    tpu.wait_dma2 semaphore(%67 : memref<!tpu.dma_semaphore, #tpu.memory_space<semaphore_mem>>) src(%64 : memref<1x32xf32, #tpu.memory_space<any>>) dst(%65 : memref<1x32xf32, #tpu.memory_space<vmem>>)
    %c7_i32_52 = arith.constant 7 : i32
    %c0_i32_53 = arith.constant 0 : i32
    %68 = tpu.memref_slice %arg1[%35, %c0_i32_53] : memref<5000x32xf32, #tpu.memory_space<any>> -> memref<1x32xf32, #tpu.memory_space<any>>
    %c7_i32_54 = arith.constant 7 : i32
    %c0_i32_55 = arith.constant 0 : i32
    %69 = tpu.memref_slice %arg4[%c7_i32_54, %c0_i32_55] : memref<8x32xf32, #tpu.memory_space<vmem>> -> memref<1x32xf32, #tpu.memory_space<vmem>>
    %70 = tpu.memref_slice %arg5[%c7_i32_52] : memref<8x!tpu.dma_semaphore, #tpu.memory_space<semaphore_mem>> -> memref<1x!tpu.dma_semaphore, #tpu.memory_space<semaphore_mem>>
    %71 = tpu.memref_squeeze %70 : memref<1x!tpu.dma_semaphore, #tpu.memory_space<semaphore_mem>> -> memref<!tpu.dma_semaphore, #tpu.memory_space<semaphore_mem>>
    tpu.wait_dma2 semaphore(%71 : memref<!tpu.dma_semaphore, #tpu.memory_space<semaphore_mem>>) src(%68 : memref<1x32xf32, #tpu.memory_space<any>>) dst(%69 : memref<1x32xf32, #tpu.memory_space<vmem>>)
    %c0_56 = arith.constant 0 : index
    %c0_57 = arith.constant 0 : index
    %72 = vector.load %arg2[%c0_56, %c0_57] : memref<80x32xf32, #tpu.memory_space<vmem>>, vector<32x32xf32>
    %c32 = arith.constant 32 : index
    %c0_58 = arith.constant 0 : index
    %73 = vector.load %arg2[%c32, %c0_58] : memref<80x32xf32, #tpu.memory_space<vmem>>, vector<1x32xf32>
    %c40 = arith.constant 40 : index
    %c0_59 = arith.constant 0 : index
    %74 = vector.load %arg2[%c40, %c0_59] : memref<80x32xf32, #tpu.memory_space<vmem>>, vector<32x32xf32>
    %c72 = arith.constant 72 : index
    %c0_60 = arith.constant 0 : index
    %75 = vector.load %arg2[%c72, %c0_60] : memref<80x32xf32, #tpu.memory_space<vmem>>, vector<1x32xf32>
    %c0_61 = arith.constant 0 : index
    %c0_62 = arith.constant 0 : index
    %76 = vector.load %arg4[%c0_61, %c0_62] : memref<8x32xf32, #tpu.memory_space<vmem>>, vector<8x32xf32>
    %cst = arith.constant dense<0.000000e+00> : vector<8x32xf32>
    %77 = tpu.matmul %76, %72, %cst {dimension_numbers = #tpu.dot_dimension_numbers<[1], [0], [0], [1], [0, 0, 1, 1], [], []>} : vector<8x32xf32>, vector<32x32xf32>, vector<8x32xf32> -> vector<8x32xf32>
    %78 = vector.broadcast %73 : vector<1x32xf32> to vector<8x32xf32>
    %79 = arith.addf %77, %78 : vector<8x32xf32>
    %80 = arith.negf %79 : vector<8x32xf32>
    %81 = math.exp %80 : vector<8x32xf32>
    %cst_63 = arith.constant 1.000000e+00 : f32
    %82 = vector.broadcast %cst_63 : f32 to vector<8x32xf32>
    %83 = arith.addf %82, %81 : vector<8x32xf32>
    %84 = arith.divf %82, %83 : vector<8x32xf32>
    %85 = arith.mulf %79, %84 : vector<8x32xf32>
    %cst_64 = arith.constant dense<0.000000e+00> : vector<8x32xf32>
    %86 = tpu.matmul %85, %74, %cst_64 {dimension_numbers = #tpu.dot_dimension_numbers<[1], [0], [0], [1], [0, 0, 1, 1], [], []>} : vector<8x32xf32>, vector<32x32xf32>, vector<8x32xf32> -> vector<8x32xf32>
    %87 = vector.broadcast %75 : vector<1x32xf32> to vector<8x32xf32>
    %88 = arith.addf %86, %87 : vector<8x32xf32>
    %c0_65 = arith.constant 0 : index
    %c0_66 = arith.constant 0 : index
    %89 = vector.load %arg3[%c0_65, %c0_66] : memref<8x32xf32, #tpu.memory_space<vmem>>, vector<8x32xf32>
    tpu.vector_store %arg3[%c0_65, %c0_66], %88 {strides = array<i32>} : memref<8x32xf32, #tpu.memory_space<vmem>>, vector<8x32xf32>,
    return
  }
}

</mosaic_0001>

<llo_original>
// kernel: tpu_custom_call.1
$region0: #{tpu_custom_call.1}
  #allocation0 [shape = 'u32[]', space=smem, size = 0x4, offset = 0x4, fixed_abs, tag = 'smem constant byte address 0x4 - core index']
  #allocation1 [shape = 'u32[144,128]{1,0:T(1,128)}', space=vmem, size = 0x12000, scoped, tag = 'internal scratch']
  #allocation2 [shape = 'f32[8,32]{1,0:T(8,128)}', space=vmem, size = 0x1000, scoped, tag = 'scratch operand']
  #allocation3 [shape = 's32[8]{0}', space=sflag, size = 0x20, scoped, tag = 'scratch operand']
  #allocation4 [shape = 's32[1]{0}', space=sflag, size = 0x4, scoped, tag = 'scoped memory for tpu_custom_call.1']
  #allocation5 [shape = 'u8[512]{0}', space=smem, size = 0x200, scoped, tag = 'prefetched SMEM operand 0']
  #allocation8 [shape = 's32[]', space=sflag, size = 0x4, offset = 0, fixed_abs, tag = 'sflag constant byte address 0x0 - dummy sync flag']
  #allocation9 [shape = 's32[]', space=sflag, size = 0x4, offset = 0, fixed_abs, tag = 'sflag constant byte address 0x0 - dummy sync flag']
  #allocation10 [shape = 's32[]', space=sflag, size = 0x4, offset = 0, fixed_abs, tag = 'sflag constant byte address 0x0 - dummy sync flag']
  #allocation11 [shape = 's32[]', space=sflag, size = 0x4, offset = 0, fixed_abs, tag = 'sflag constant byte address 0x0 - dummy sync flag']
  #allocation12 [shape = 's32[]', space=sflag, size = 0x4, offset = 0, fixed_abs, tag = 'sflag constant byte address 0x0 - dummy sync flag']
  #allocation13 [shape = 's32[]', space=sflag, size = 0x4, offset = 0, fixed_abs, tag = 'sflag constant byte address 0x0 - dummy sync flag']
  #allocation14 [shape = 's32[]', space=sflag, size = 0x4, offset = 0, fixed_abs, tag = 'sflag constant byte address 0x0 - dummy sync flag']
  #allocation15 [shape = 's32[]', space=sflag, size = 0x4, offset = 0, fixed_abs, tag = 'sflag constant byte address 0x0 - dummy sync flag']
  %s0 = inlined_call_operand.vmem [shape: s32[8], index: 0, kind: input, shape index: {}]
  %s1 = inlined_call_operand.vmem [shape: f32[5000,32], index: 1, kind: input, shape index: {}]
  %s2 = inlined_call_operand.vmem [shape: f32[80,32], index: 2, kind: input, shape index: {}]
  %s3 = inlined_call_operand.hbm [shape: f32[8,32], index: 3, kind: output, shape index: {}]
  %s4 = sld [smem:[#allocation0]]
  $region254: #{tpu_custom_call.1} parent=0
    _
  %s6 = ssub.s32 1, %s4
  %s7 = scalar_select 0, %s6, %s4
  %s8 = sshll.u32 %s0, 4
  %s9 = int_to_ptr.vmem [resolvable:$true] %s8
  %11 = dma.vmem_to_smem %s9, 16, [#allocation5], [#allocation4]
  %12 = dma.done [#allocation4], 16
  %13 = sfence
  $region1: #{tpu_custom_call.1} parent=0
    #allocation6 [shape = 'u8[4096]{0}', space=vmem, size = 0x1000, scoped, tag = 'output window, operand 0, single buffered']
    #allocation7 [shape = 's32[1]{0}', space=sflag, size = 0x4, scoped, tag = 'scoped memory for tpu_custom_call.1']
    %14 = vsyncpa [#allocation7], 0
    // Predicated region
    $region2: #{tpu_custom_call.1} parent=1 // pred_check
      _
    $region3: #{tpu_custom_call.1} parent=1 // pred_check_branch
      %16 = sbr.rel (0) target = $region5
    $region4: #{tpu_custom_call.1} parent=1 // pred_region
      _
    $region5: #{tpu_custom_call.1} parent=1 // pred_fallthru
      _
    %s17 = sld [smem:[#allocation5]]
    %s18 = scalar_lea.vmem %s1, %s17
    %p20 = scmp.lt.u32.totalorder 1, 8
    %p21 = pneg %p20
    // Predicated region
    $region6: #{tpu_custom_call.1} parent=1 // pred_check
      _
    $region7: #{tpu_custom_call.1} parent=1 // pred_check_branch
      %23 = sbr.rel (%p20) target = $region9
    $region8: #{tpu_custom_call.1} parent=1 // pred_region
      %s38 = sand.u32 1, 7
      %p39 = scmp.eq.s32.totalorder %s38, 0
      %p40 = pneg %p39
      // Predicated region
      $region21: #{tpu_custom_call.1} parent=8 // pred_check
        _
      $region22: #{tpu_custom_call.1} parent=8 // pred_check_branch
        %42 = sbr.rel (%p39) target = $region24
      $region23: #{tpu_custom_call.1} parent=8 // pred_region
        %s43 = sand.u32 1, 7
        %s44 = ssub.s32 1, %s43
        %s45 = scalar_lea.vmem %s18, %s44
        %s46 = ssub.s32 1, %s43
        %s47 = scalar_lea.vmem [#allocation2], %s46
        %s48 = sshllo.u32 0, %s43
        loop: start=0, step=1, limit=1
        $region25: #{tpu_custom_call.1} parent=23 // loop_pre_header
          _
        $region26: #{tpu_custom_call.1} parent=23 // loop_header
          %s50 = sphi 0, %s54
          %p51 = scmp.ge.s32.totalorder %s50, 1
          %s55 = sphi %s45, %s45
          %s56 = sphi %s47, %s47
        $region27: #{tpu_custom_call.1} parent=23 // loop_header_branch
          %53 = sbr.rel (%p51) target = $region31
        $region28: #{tpu_custom_call.1} parent=23 // loop_body
          %v57 = vld [vmem:[%s55] sm:%s48]
          %58 = vst [vmem:[%s56] sm:%s48] %v57
        $region29: #{tpu_custom_call.1} parent=23 // loop_footer
          %s54 = sadd.s32 1, %s50
        $region30: #{tpu_custom_call.1} parent=23 // loop_footer_branch
          %49 = sbr.rel target = $region26
        $region31: #{tpu_custom_call.1} parent=23 // loop_exit
          _
      $region24: #{tpu_custom_call.1} parent=8 // pred_fallthru
        _
    $region9: #{tpu_custom_call.1} parent=1 // pred_fallthru
      _
    // Predicated region
    $region10: #{tpu_custom_call.1} parent=1 // pred_check
      %p24 = pneg %p20
    $region11: #{tpu_custom_call.1} parent=1 // pred_check_branch
      %26 = sbr.rel (%p24) target = $region13
    $region12: #{tpu_custom_call.1} parent=1 // pred_region
      %s27 = sshllo.u32 0, 1
      loop: start=0, step=1, limit=1
      $region14: #{tpu_custom_call.1} parent=12 // loop_pre_header
        _
      $region15: #{tpu_custom_call.1} parent=12 // loop_header
        %s29 = sphi 0, %s33
        %p30 = scmp.ge.s32.totalorder %s29, 1
        %s34 = sphi %s18, %s18
        %s35 = sphi [#allocation2], [#allocation2]
      $region16: #{tpu_custom_call.1} parent=12 // loop_header_branch
        %32 = sbr.rel (%p30) target = $region20
      $region17: #{tpu_custom_call.1} parent=12 // loop_body
        %v36 = vld [vmem:[%s34] sm:%s27]
        %37 = vst [vmem:[%s35] sm:%s27] %v36
      $region18: #{tpu_custom_call.1} parent=12 // loop_footer
        %s33 = sadd.s32 1, %s29
      $region19: #{tpu_custom_call.1} parent=12 // loop_footer_branch
        %28 = sbr.rel target = $region15
      $region20: #{tpu_custom_call.1} parent=12 // loop_exit
        _
    $region13: #{tpu_custom_call.1} parent=1 // pred_fallthru
      _
    // Predicated region
    $region32: #{tpu_custom_call.1} parent=1 // pred_check
      _
    $region33: #{tpu_custom_call.1} parent=1 // pred_check_branch
      %61 = sbr.rel (0) target = $region35
    $region34: #{tpu_custom_call.1} parent=1 // pred_region
      %62 = vsyncadd [#allocation3], 16
    $region35: #{tpu_custom_call.1} parent=1 // pred_fallthru
      _
    %s63 = sld [smem:[#allocation5 + $0x1]]
    %s64 = scalar_lea.vmem %s1, %s63
    %s65 = scalar_lea.vmem [#allocation2], 1
    %s66 = scalar_lea.sflag [#allocation3], 1
    %p68 = scmp.lt.u32.totalorder 1, 8
    %p69 = pneg %p68
    // Predicated region
    $region36: #{tpu_custom_call.1} parent=1 // pred_check
      _
    $region37: #{tpu_custom_call.1} parent=1 // pred_check_branch
      %71 = sbr.rel (%p68) target = $region39
    $region38: #{tpu_custom_call.1} parent=1 // pred_region
      %s86 = sand.u32 1, 7
      %p87 = scmp.eq.s32.totalorder %s86, 0
      %p88 = pneg %p87
      // Predicated region
      $region51: #{tpu_custom_call.1} parent=38 // pred_check
        _
      $region52: #{tpu_custom_call.1} parent=38 // pred_check_branch
        %90 = sbr.rel (%p87) target = $region54
      $region53: #{tpu_custom_call.1} parent=38 // pred_region
        %s91 = sand.u32 1, 7
        %s92 = ssub.s32 1, %s91
        %s93 = scalar_lea.vmem %s64, %s92
        %s94 = ssub.s32 1, %s91
        %s95 = scalar_lea.vmem %s65, %s94 [#allocation2]
        %s96 = sshllo.u32 0, %s91
        loop: start=0, step=1, limit=1
        $region55: #{tpu_custom_call.1} parent=53 // loop_pre_header
          _
        $region56: #{tpu_custom_call.1} parent=53 // loop_header
          %s98 = sphi 0, %s102
          %p99 = scmp.ge.s32.totalorder %s98, 1
          %s103 = sphi %s93, %s93
          %s104 = sphi %s95, %s95
        $region57: #{tpu_custom_call.1} parent=53 // loop_header_branch
          %101 = sbr.rel (%p99) target = $region61
        $region58: #{tpu_custom_call.1} parent=53 // loop_body
          %v105 = vld [vmem:[%s103] sm:%s96]
          %106 = vst [vmem:[%s104] sm:%s96] %v105
        $region59: #{tpu_custom_call.1} parent=53 // loop_footer
          %s102 = sadd.s32 1, %s98
        $region60: #{tpu_custom_call.1} parent=53 // loop_footer_branch
          %97 = sbr.rel target = $region56
        $region61: #{tpu_custom_call.1} parent=53 // loop_exit
          _
      $region54: #{tpu_custom_call.1} parent=38 // pred_fallthru
        _
    $region39: #{tpu_custom_call.1} parent=1 // pred_fallthru
      _
    // Predicated region
    $region40: #{tpu_custom_call.1} parent=1 // pred_check
      %p72 = pneg %p68
    $region41: #{tpu_custom_call.1} parent=1 // pred_check_branch
      %74 = sbr.rel (%p72) target = $region43
    $region42: #{tpu_custom_call.1} parent=1 // pred_region
      %s75 = sshllo.u32 0, 1
      loop: start=0, step=1, limit=1
      $region44: #{tpu_custom_call.1} parent=42 // loop_pre_header
        _
      $region45: #{tpu_custom_call.1} parent=42 // loop_header
        %s77 = sphi 0, %s81
        %p78 = scmp.ge.s32.totalorder %s77, 1
        %s82 = sphi %s64, %s64
        %s83 = sphi %s65, %s65
      $region46: #{tpu_custom_call.1} parent=42 // loop_header_branch
        %80 = sbr.rel (%p78) target = $region50
      $region47: #{tpu_custom_call.1} parent=42 // loop_body
        %v84 = vld [vmem:[%s82] sm:%s75]
        %85 = vst [vmem:[%s83] sm:%s75] %v84
      $region48: #{tpu_custom_call.1} parent=42 // loop_footer
        %s81 = sadd.s32 1, %s77
      $region49: #{tpu_custom_call.1} parent=42 // loop_footer_branch
        %76 = sbr.rel target = $region45
      $region50: #{tpu_custom_call.1} parent=42 // loop_exit
        _
    $region43: #{tpu_custom_call.1} parent=1 // pred_fallthru
      _
    // Predicated region
    $region62: #{tpu_custom_call.1} parent=1 // pred_check
      _
    $region63: #{tpu_custom_call.1} parent=1 // pred_check_branch
      %109 = sbr.rel (0) target = $region65
    $region64: #{tpu_custom_call.1} parent=1 // pred_region
      %110 = vsyncadd %s66, 16
    $region65: #{tpu_custom_call.1} parent=1 // pred_fallthru
      _
    %s111 = sld [smem:[#allocation5 + $0x2]]
    %s112 = scalar_lea.vmem %s1, %s111
    %s113 = scalar_lea.vmem [#allocation2], 2
    %s114 = scalar_lea.sflag [#allocation3], 2
    %p116 = scmp.lt.u32.totalorder 1, 8
    %p117 = pneg %p116
    // Predicated region
    $region66: #{tpu_custom_call.1} parent=1 // pred_check
      _
    $region67: #{tpu_custom_call.1} parent=1 // pred_check_branch
      %119 = sbr.rel (%p116) target = $region69
    $region68: #{tpu_custom_call.1} parent=1 // pred_region
      %s134 = sand.u32 1, 7
      %p135 = scmp.eq.s32.totalorder %s134, 0
      %p136 = pneg %p135
      // Predicated region
      $region81: #{tpu_custom_call.1} parent=68 // pred_check
        _
      $region82: #{tpu_custom_call.1} parent=68 // pred_check_branch
        %138 = sbr.rel (%p135) target = $region84
      $region83: #{tpu_custom_call.1} parent=68 // pred_region
        %s139 = sand.u32 1, 7
        %s140 = ssub.s32 1, %s139
        %s141 = scalar_lea.vmem %s112, %s140
        %s142 = ssub.s32 1, %s139
        %s143 = scalar_lea.vmem %s113, %s142 [#allocation2]
        %s144 = sshllo.u32 0, %s139
        loop: start=0, step=1, limit=1
        $region85: #{tpu_custom_call.1} parent=83 // loop_pre_header
          _
        $region86: #{tpu_custom_call.1} parent=83 // loop_header
          %s146 = sphi 0, %s150
          %p147 = scmp.ge.s32.totalorder %s146, 1
          %s151 = sphi %s141, %s141
          %s152 = sphi %s143, %s143
        $region87: #{tpu_custom_call.1} parent=83 // loop_header_branch
          %149 = sbr.rel (%p147) target = $region91
        $region88: #{tpu_custom_call.1} parent=83 // loop_body
          %v153 = vld [vmem:[%s151] sm:%s144]
          %154 = vst [vmem:[%s152] sm:%s144] %v153
        $region89: #{tpu_custom_call.1} parent=83 // loop_footer
          %s150 = sadd.s32 1, %s146
        $region90: #{tpu_custom_call.1} parent=83 // loop_footer_branch
          %145 = sbr.rel target = $region86
        $region91: #{tpu_custom_call.1} parent=83 // loop_exit
          _
      $region84: #{tpu_custom_call.1} parent=68 // pred_fallthru
        _
    $region69: #{tpu_custom_call.1} parent=1 // pred_fallthru
      _
    // Predicated region
    $region70: #{tpu_custom_call.1} parent=1 // pred_check
      %p120 = pneg %p116
    $region71: #{tpu_custom_call.1} parent=1 // pred_check_branch
      %122 = sbr.rel (%p120) target = $region73
    $region72: #{tpu_custom_call.1} parent=1 // pred_region
      %s123 = sshllo.u32 0, 1
      loop: start=0, step=1, limit=1
      $region74: #{tpu_custom_call.1} parent=72 // loop_pre_header
        _
      $region75: #{tpu_custom_call.1} parent=72 // loop_header
        %s125 = sphi 0, %s129
        %p126 = scmp.ge.s32.totalorder %s125, 1
        %s130 = sphi %s112, %s112
        %s131 = sphi %s113, %s113
      $region76: #{tpu_custom_call.1} parent=72 // loop_header_branch
        %128 = sbr.rel (%p126) target = $region80
      $region77: #{tpu_custom_call.1} parent=72 // loop_body
        %v132 = vld [vmem:[%s130] sm:%s123]
        %133 = vst [vmem:[%s131] sm:%s123] %v132
      $region78: #{tpu_custom_call.1} parent=72 // loop_footer
        %s129 = sadd.s32 1, %s125
      $region79: #{tpu_custom_call.1} parent=72 // loop_footer_branch
        %124 = sbr.rel target = $region75
      $region80: #{tpu_custom_call.1} parent=72 // loop_exit
        _
    $region73: #{tpu_custom_call.1} parent=1 // pred_fallthru
      _
    // Predicated region
    $region92: #{tpu_custom_call.1} parent=1 // pred_check
      _
    $region93: #{tpu_custom_call.1} parent=1 // pred_check_branch
      %157 = sbr.rel (0) target = $region95
    $region94: #{tpu_custom_call.1} parent=1 // pred_region
      %158 = vsyncadd %s114, 16
    $region95: #{tpu_custom_call.1} parent=1 // pred_fallthru
      _
    %s159 = sld [smem:[#allocation5 + $0x3]]
    %s160 = scalar_lea.vmem %s1, %s159
    %s161 = scalar_lea.vmem [#allocation2], 3
    %s162 = scalar_lea.sflag [#allocation3], 3
    %p164 = scmp.lt.u32.totalorder 1, 8
    %p165 = pneg %p164
    // Predicated region
    $region96: #{tpu_custom_call.1} parent=1 // pred_check
      _
    $region97: #{tpu_custom_call.1} parent=1 // pred_check_branch
      %167 = sbr.rel (%p164) target = $region99
    $region98: #{tpu_custom_call.1} parent=1 // pred_region
      %s182 = sand.u32 1, 7
      %p183 = scmp.eq.s32.totalorder %s182, 0
      %p184 = pneg %p183
      // Predicated region
      $region111: #{tpu_custom_call.1} parent=98 // pred_check
        _
      $region112: #{tpu_custom_call.1} parent=98 // pred_check_branch
        %186 = sbr.rel (%p183) target = $region114
      $region113: #{tpu_custom_call.1} parent=98 // pred_region
        %s187 = sand.u32 1, 7
        %s188 = ssub.s32 1, %s187
        %s189 = scalar_lea.vmem %s160, %s188
        %s190 = ssub.s32 1, %s187
        %s191 = scalar_lea.vmem %s161, %s190 [#allocation2]
        %s192 = sshllo.u32 0, %s187
        loop: start=0, step=1, limit=1
        $region115: #{tpu_custom_call.1} parent=113 // loop_pre_header
          _
        $region116: #{tpu_custom_call.1} parent=113 // loop_header
          %s194 = sphi 0, %s198
          %p195 = scmp.ge.s32.totalorder %s194, 1
          %s199 = sphi %s189, %s189
          %s200 = sphi %s191, %s191
        $region117: #{tpu_custom_call.1} parent=113 // loop_header_branch
          %197 = sbr.rel (%p195) target = $region121
        $region118: #{tpu_custom_call.1} parent=113 // loop_body
          %v201 = vld [vmem:[%s199] sm:%s192]
          %202 = vst [vmem:[%s200] sm:%s192] %v201
        $region119: #{tpu_custom_call.1} parent=113 // loop_footer
          %s198 = sadd.s32 1, %s194
        $region120: #{tpu_custom_call.1} parent=113 // loop_footer_branch
          %193 = sbr.rel target = $region116
        $region121: #{tpu_custom_call.1} parent=113 // loop_exit
          _
      $region114: #{tpu_custom_call.1} parent=98 // pred_fallthru
        _
    $region99: #{tpu_custom_call.1} parent=1 // pred_fallthru
      _
    // Predicated region
    $region100: #{tpu_custom_call.1} parent=1 // pred_check
      %p168 = pneg %p164
    $region101: #{tpu_custom_call.1} parent=1 // pred_check_branch
      %170 = sbr.rel (%p168) target = $region103
    $region102: #{tpu_custom_call.1} parent=1 // pred_region
      %s171 = sshllo.u32 0, 1
      loop: start=0, step=1, limit=1
      $region104: #{tpu_custom_call.1} parent=102 // loop_pre_header
        _
      $region105: #{tpu_custom_call.1} parent=102 // loop_header
        %s173 = sphi 0, %s177
        %p174 = scmp.ge.s32.totalorder %s173, 1
        %s178 = sphi %s160, %s160
        %s179 = sphi %s161, %s161
      $region106: #{tpu_custom_call.1} parent=102 // loop_header_branch
        %176 = sbr.rel (%p174) target = $region110
      $region107: #{tpu_custom_call.1} parent=102 // loop_body
        %v180 = vld [vmem:[%s178] sm:%s171]
        %181 = vst [vmem:[%s179] sm:%s171] %v180
      $region108: #{tpu_custom_call.1} parent=102 // loop_footer
        %s177 = sadd.s32 1, %s173
      $region109: #{tpu_custom_call.1} parent=102 // loop_footer_branch
        %172 = sbr.rel target = $region105
      $region110: #{tpu_custom_call.1} parent=102 // loop_exit
        _
    $region103: #{tpu_custom_call.1} parent=1 // pred_fallthru
      _
    // Predicated region
    $region122: #{tpu_custom_call.1} parent=1 // pred_check
      _
    $region123: #{tpu_custom_call.1} parent=1 // pred_check_branch
      %205 = sbr.rel (0) target = $region125
    $region124: #{tpu_custom_call.1} parent=1 // pred_region
      %206 = vsyncadd %s162, 16
    $region125: #{tpu_custom_call.1} parent=1 // pred_fallthru
      _
    %s207 = sld [smem:[#allocation5 + $0x4]]
    %s208 = scalar_lea.vmem %s1, %s207
    %s209 = scalar_lea.vmem [#allocation2], 4
    %s210 = scalar_lea.sflag [#allocation3], 4
    %p212 = scmp.lt.u32.totalorder 1, 8
    %p213 = pneg %p212
    // Predicated region
    $region126: #{tpu_custom_call.1} parent=1 // pred_check
      _
    $region127: #{tpu_custom_call.1} parent=1 // pred_check_branch
      %215 = sbr.rel (%p212) target = $region129
    $region128: #{tpu_custom_call.1} parent=1 // pred_region
      %s230 = sand.u32 1, 7
      %p231 = scmp.eq.s32.totalorder %s230, 0
      %p232 = pneg %p231
      // Predicated region
      $region141: #{tpu_custom_call.1} parent=128 // pred_check
        _
      $region142: #{tpu_custom_call.1} parent=128 // pred_check_branch
        %234 = sbr.rel (%p231) target = $region144
      $region143: #{tpu_custom_call.1} parent=128 // pred_region
        %s235 = sand.u32 1, 7
        %s236 = ssub.s32 1, %s235
        %s237 = scalar_lea.vmem %s208, %s236
        %s238 = ssub.s32 1, %s235
        %s239 = scalar_lea.vmem %s209, %s238 [#allocation2]
        %s240 = sshllo.u32 0, %s235
        loop: start=0, step=1, limit=1
        $region145: #{tpu_custom_call.1} parent=143 // loop_pre_header
          _
        $region146: #{tpu_custom_call.1} parent=143 // loop_header
          %s242 = sphi 0, %s246
          %p243 = scmp.ge.s32.totalorder %s242, 1
          %s247 = sphi %s237, %s237
          %s248 = sphi %s239, %s239
        $region147: #{tpu_custom_call.1} parent=143 // loop_header_branch
          %245 = sbr.rel (%p243) target = $region151
        $region148: #{tpu_custom_call.1} parent=143 // loop_body
          %v249 = vld [vmem:[%s247] sm:%s240]
          %250 = vst [vmem:[%s248] sm:%s240] %v249
        $region149: #{tpu_custom_call.1} parent=143 // loop_footer
          %s246 = sadd.s32 1, %s242
        $region150: #{tpu_custom_call.1} parent=143 // loop_footer_branch
          %241 = sbr.rel target = $region146
        $region151: #{tpu_custom_call.1} parent=143 // loop_exit
          _
      $region144: #{tpu_custom_call.1} parent=128 // pred_fallthru
        _
    $region129: #{tpu_custom_call.1} parent=1 // pred_fallthru
      _
    // Predicated region
    $region130: #{tpu_custom_call.1} parent=1 // pred_check
      %p216 = pneg %p212
    $region131: #{tpu_custom_call.1} parent=1 // pred_check_branch
      %218 = sbr.rel (%p216) target = $region133
    $region132: #{tpu_custom_call.1} parent=1 // pred_region
      %s219 = sshllo.u32 0, 1
      loop: start=0, step=1, limit=1
      $region134: #{tpu_custom_call.1} parent=132 // loop_pre_header
        _
      $region135: #{tpu_custom_call.1} parent=132 // loop_header
        %s221 = sphi 0, %s225
        %p222 = scmp.ge.s32.totalorder %s221, 1
        %s226 = sphi %s208, %s208
        %s227 = sphi %s209, %s209
      $region136: #{tpu_custom_call.1} parent=132 // loop_header_branch
        %224 = sbr.rel (%p222) target = $region140
      $region137: #{tpu_custom_call.1} parent=132 // loop_body
        %v228 = vld [vmem:[%s226] sm:%s219]
        %229 = vst [vmem:[%s227] sm:%s219] %v228
      $region138: #{tpu_custom_call.1} parent=132 // loop_footer
        %s225 = sadd.s32 1, %s221
      $region139: #{tpu_custom_call.1} parent=132 // loop_footer_branch
        %220 = sbr.rel target = $region135
      $region140: #{tpu_custom_call.1} parent=132 // loop_exit
        _
    $region133: #{tpu_custom_call.1} parent=1 // pred_fallthru
      _
    // Predicated region
    $region152: #{tpu_custom_call.1} parent=1 // pred_check
      _
    $region153: #{tpu_custom_call.1} parent=1 // pred_check_branch
      %253 = sbr.rel (0) target = $region155
    $region154: #{tpu_custom_call.1} parent=1 // pred_region
      %254 = vsyncadd %s210, 16
    $region155: #{tpu_custom_call.1} parent=1 // pred_fallthru
      _
    %s255 = sld [smem:[#allocation5 + $0x5]]
    %s256 = scalar_lea.vmem %s1, %s255
    %s257 = scalar_lea.vmem [#allocation2], 5
    %s258 = scalar_lea.sflag [#allocation3], 5
    %p260 = scmp.lt.u32.totalorder 1, 8
    %p261 = pneg %p260
    // Predicated region
    $region156: #{tpu_custom_call.1} parent=1 // pred_check
      _
    $region157: #{tpu_custom_call.1} parent=1 // pred_check_branch
      %263 = sbr.rel (%p260) target = $region159
    $region158: #{tpu_custom_call.1} parent=1 // pred_region
      %s278 = sand.u32 1, 7
      %p279 = scmp.eq.s32.totalorder %s278, 0
      %p280 = pneg %p279
      // Predicated region
      $region171: #{tpu_custom_call.1} parent=158 // pred_check
        _
      $region172: #{tpu_custom_call.1} parent=158 // pred_check_branch
        %282 = sbr.rel (%p279) target = $region174
      $region173: #{tpu_custom_call.1} parent=158 // pred_region
        %s283 = sand.u32 1, 7
        %s284 = ssub.s32 1, %s283
        %s285 = scalar_lea.vmem %s256, %s284
        %s286 = ssub.s32 1, %s283
        %s287 = scalar_lea.vmem %s257, %s286 [#allocation2]
        %s288 = sshllo.u32 0, %s283
        loop: start=0, step=1, limit=1
        $region175: #{tpu_custom_call.1} parent=173 // loop_pre_header
          _
        $region176: #{tpu_custom_call.1} parent=173 // loop_header
          %s290 = sphi 0, %s294
          %p291 = scmp.ge.s32.totalorder %s290, 1
          %s295 = sphi %s285, %s285
          %s296 = sphi %s287, %s287
        $region177: #{tpu_custom_call.1} parent=173 // loop_header_branch
          %293 = sbr.rel (%p291) target = $region181
        $region178: #{tpu_custom_call.1} parent=173 // loop_body
          %v297 = vld [vmem:[%s295] sm:%s288]
          %298 = vst [vmem:[%s296] sm:%s288] %v297
        $region179: #{tpu_custom_call.1} parent=173 // loop_footer
          %s294 = sadd.s32 1, %s290
        $region180: #{tpu_custom_call.1} parent=173 // loop_footer_branch
          %289 = sbr.rel target = $region176
        $region181: #{tpu_custom_call.1} parent=173 // loop_exit
          _
      $region174: #{tpu_custom_call.1} parent=158 // pred_fallthru
        _
    $region159: #{tpu_custom_call.1} parent=1 // pred_fallthru
      _
    // Predicated region
    $region160: #{tpu_custom_call.1} parent=1 // pred_check
      %p264 = pneg %p260
    $region161: #{tpu_custom_call.1} parent=1 // pred_check_branch
      %266 = sbr.rel (%p264) target = $region163
    $region162: #{tpu_custom_call.1} parent=1 // pred_region
      %s267 = sshllo.u32 0, 1
      loop: start=0, step=1, limit=1
      $region164: #{tpu_custom_call.1} parent=162 // loop_pre_header
        _
      $region165: #{tpu_custom_call.1} parent=162 // loop_header
        %s269 = sphi 0, %s273
        %p270 = scmp.ge.s32.totalorder %s269, 1
        %s274 = sphi %s256, %s256
        %s275 = sphi %s257, %s257
      $region166: #{tpu_custom_call.1} parent=162 // loop_header_branch
        %272 = sbr.rel (%p270) target = $region170
      $region167: #{tpu_custom_call.1} parent=162 // loop_body
        %v276 = vld [vmem:[%s274] sm:%s267]
        %277 = vst [vmem:[%s275] sm:%s267] %v276
      $region168: #{tpu_custom_call.1} parent=162 // loop_footer
        %s273 = sadd.s32 1, %s269
      $region169: #{tpu_custom_call.1} parent=162 // loop_footer_branch
        %268 = sbr.rel target = $region165
      $region170: #{tpu_custom_call.1} parent=162 // loop_exit
        _
    $region163: #{tpu_custom_call.1} parent=1 // pred_fallthru
      _
    // Predicated region
    $region182: #{tpu_custom_call.1} parent=1 // pred_check
      _
    $region183: #{tpu_custom_call.1} parent=1 // pred_check_branch
      %301 = sbr.rel (0) target = $region185
    $region184: #{tpu_custom_call.1} parent=1 // pred_region
      %302 = vsyncadd %s258, 16
    $region185: #{tpu_custom_call.1} parent=1 // pred_fallthru
      _
    %s303 = sld [smem:[#allocation5 + $0x6]]
    %s304 = scalar_lea.vmem %s1, %s303
    %s305 = scalar_lea.vmem [#allocation2], 6
    %s306 = scalar_lea.sflag [#allocation3], 6
    %p308 = scmp.lt.u32.totalorder 1, 8
    %p309 = pneg %p308
    // Predicated region
    $region186: #{tpu_custom_call.1} parent=1 // pred_check
      _
    $region187: #{tpu_custom_call.1} parent=1 // pred_check_branch
      %311 = sbr.rel (%p308) target = $region189
    $region188: #{tpu_custom_call.1} parent=1 // pred_region
      %s326 = sand.u32 1, 7
      %p327 = scmp.eq.s32.totalorder %s326, 0
      %p328 = pneg %p327
      // Predicated region
      $region201: #{tpu_custom_call.1} parent=188 // pred_check
        _
      $region202: #{tpu_custom_call.1} parent=188 // pred_check_branch
        %330 = sbr.rel (%p327) target = $region204
      $region203: #{tpu_custom_call.1} parent=188 // pred_region
        %s331 = sand.u32 1, 7
        %s332 = ssub.s32 1, %s331
        %s333 = scalar_lea.vmem %s304, %s332
        %s334 = ssub.s32 1, %s331
        %s335 = scalar_lea.vmem %s305, %s334 [#allocation2]
        %s336 = sshllo.u32 0, %s331
        loop: start=0, step=1, limit=1
        $region205: #{tpu_custom_call.1} parent=203 // loop_pre_header
          _
        $region206: #{tpu_custom_call.1} parent=203 // loop_header
          %s338 = sphi 0, %s342
          %p339 = scmp.ge.s32.totalorder %s338, 1
          %s343 = sphi %s333, %s333
          %s344 = sphi %s335, %s335
        $region207: #{tpu_custom_call.1} parent=203 // loop_header_branch
          %341 = sbr.rel (%p339) target = $region211
        $region208: #{tpu_custom_call.1} parent=203 // loop_body
          %v345 = vld [vmem:[%s343] sm:%s336]
          %346 = vst [vmem:[%s344] sm:%s336] %v345
        $region209: #{tpu_custom_call.1} parent=203 // loop_footer
          %s342 = sadd.s32 1, %s338
        $region210: #{tpu_custom_call.1} parent=203 // loop_footer_branch
          %337 = sbr.rel target = $region206
        $region211: #{tpu_custom_call.1} parent=203 // loop_exit
          _
      $region204: #{tpu_custom_call.1} parent=188 // pred_fallthru
        _
    $region189: #{tpu_custom_call.1} parent=1 // pred_fallthru
      _
    // Predicated region
    $region190: #{tpu_custom_call.1} parent=1 // pred_check
      %p312 = pneg %p308
    $region191: #{tpu_custom_call.1} parent=1 // pred_check_branch
      %314 = sbr.rel (%p312) target = $region193
    $region192: #{tpu_custom_call.1} parent=1 // pred_region
      %s315 = sshllo.u32 0, 1
      loop: start=0, step=1, limit=1
      $region194: #{tpu_custom_call.1} parent=192 // loop_pre_header
        _
      $region195: #{tpu_custom_call.1} parent=192 // loop_header
        %s317 = sphi 0, %s321
        %p318 = scmp.ge.s32.totalorder %s317, 1
        %s322 = sphi %s304, %s304
        %s323 = sphi %s305, %s305
      $region196: #{tpu_custom_call.1} parent=192 // loop_header_branch
        %320 = sbr.rel (%p318) target = $region200
      $region197: #{tpu_custom_call.1} parent=192 // loop_body
        %v324 = vld [vmem:[%s322] sm:%s315]
        %325 = vst [vmem:[%s323] sm:%s315] %v324
      $region198: #{tpu_custom_call.1} parent=192 // loop_footer
        %s321 = sadd.s32 1, %s317
      $region199: #{tpu_custom_call.1} parent=192 // loop_footer_branch
        %316 = sbr.rel target = $region195
      $region200: #{tpu_custom_call.1} parent=192 // loop_exit
        _
    $region193: #{tpu_custom_call.1} parent=1 // pred_fallthru
      _
    // Predicated region
    $region212: #{tpu_custom_call.1} parent=1 // pred_check
      _
    $region213: #{tpu_custom_call.1} parent=1 // pred_check_branch
      %349 = sbr.rel (0) target = $region215
    $region214: #{tpu_custom_call.1} parent=1 // pred_region
      %350 = vsyncadd %s306, 16
    $region215: #{tpu_custom_call.1} parent=1 // pred_fallthru
      _
    %s351 = sld [smem:[#allocation5 + $0x7]]
    %s352 = scalar_lea.vmem %s1, %s351
    %s353 = scalar_lea.vmem [#allocation2], 7
    %s354 = scalar_lea.sflag [#allocation3], 7
    %p356 = scmp.lt.u32.totalorder 1, 8
    %p357 = pneg %p356
    // Predicated region
    $region216: #{tpu_custom_call.1} parent=1 // pred_check
      _
    $region217: #{tpu_custom_call.1} parent=1 // pred_check_branch
      %359 = sbr.rel (%p356) target = $region219
    $region218: #{tpu_custom_call.1} parent=1 // pred_region
      %s374 = sand.u32 1, 7
      %p375 = scmp.eq.s32.totalorder %s374, 0
      %p376 = pneg %p375
      // Predicated region
      $region231: #{tpu_custom_call.1} parent=218 // pred_check
        _
      $region232: #{tpu_custom_call.1} parent=218 // pred_check_branch
        %378 = sbr.rel (%p375) target = $region234
      $region233: #{tpu_custom_call.1} parent=218 // pred_region
        %s379 = sand.u32 1, 7
        %s380 = ssub.s32 1, %s379
        %s381 = scalar_lea.vmem %s352, %s380
        %s382 = ssub.s32 1, %s379
        %s383 = scalar_lea.vmem %s353, %s382 [#allocation2]
        %s384 = sshllo.u32 0, %s379
        loop: start=0, step=1, limit=1
        $region235: #{tpu_custom_call.1} parent=233 // loop_pre_header
          _
        $region236: #{tpu_custom_call.1} parent=233 // loop_header
          %s386 = sphi 0, %s390
          %p387 = scmp.ge.s32.totalorder %s386, 1
          %s391 = sphi %s381, %s381
          %s392 = sphi %s383, %s383
        $region237: #{tpu_custom_call.1} parent=233 // loop_header_branch
          %389 = sbr.rel (%p387) target = $region241
        $region238: #{tpu_custom_call.1} parent=233 // loop_body
          %v393 = vld [vmem:[%s391] sm:%s384]
          %394 = vst [vmem:[%s392] sm:%s384] %v393
        $region239: #{tpu_custom_call.1} parent=233 // loop_footer
          %s390 = sadd.s32 1, %s386
        $region240: #{tpu_custom_call.1} parent=233 // loop_footer_branch
          %385 = sbr.rel target = $region236
        $region241: #{tpu_custom_call.1} parent=233 // loop_exit
          _
      $region234: #{tpu_custom_call.1} parent=218 // pred_fallthru
        _
    $region219: #{tpu_custom_call.1} parent=1 // pred_fallthru
      _
    // Predicated region
    $region220: #{tpu_custom_call.1} parent=1 // pred_check
      %p360 = pneg %p356
    $region221: #{tpu_custom_call.1} parent=1 // pred_check_branch
      %362 = sbr.rel (%p360) target = $region223
    $region222: #{tpu_custom_call.1} parent=1 // pred_region
      %s363 = sshllo.u32 0, 1
      loop: start=0, step=1, limit=1
      $region224: #{tpu_custom_call.1} parent=222 // loop_pre_header
        _
      $region225: #{tpu_custom_call.1} parent=222 // loop_header
        %s365 = sphi 0, %s369
        %p366 = scmp.ge.s32.totalorder %s365, 1
        %s370 = sphi %s352, %s352
        %s371 = sphi %s353, %s353
      $region226: #{tpu_custom_call.1} parent=222 // loop_header_branch
        %368 = sbr.rel (%p366) target = $region230
      $region227: #{tpu_custom_call.1} parent=222 // loop_body
        %v372 = vld [vmem:[%s370] sm:%s363]
        %373 = vst [vmem:[%s371] sm:%s363] %v372
      $region228: #{tpu_custom_call.1} parent=222 // loop_footer
        %s369 = sadd.s32 1, %s365
      $region229: #{tpu_custom_call.1} parent=222 // loop_footer_branch
        %364 = sbr.rel target = $region225
      $region230: #{tpu_custom_call.1} parent=222 // loop_exit
        _
    $region223: #{tpu_custom_call.1} parent=1 // pred_fallthru
      _
    // Predicated region
    $region242: #{tpu_custom_call.1} parent=1 // pred_check
      _
    $region243: #{tpu_custom_call.1} parent=1 // pred_check_branch
      %397 = sbr.rel (0) target = $region245
    $region244: #{tpu_custom_call.1} parent=1 // pred_region
      %398 = vsyncadd %s354, 16
    $region245: #{tpu_custom_call.1} parent=1 // pred_fallthru
      _
    %s399 = smul.u32 1, 1
    %s400 = sshll.u32 %s399, 4
    %401 = dma.done [#allocation3], %s400
    %s402 = sshll.u32 %s399, 4
    %403 = dma.done %s66, %s402
    %s404 = sshll.u32 %s399, 4
    %405 = dma.done %s114, %s404
    %s406 = sshll.u32 %s399, 4
    %407 = dma.done %s162, %s406
    %s408 = sshll.u32 %s399, 4
    %409 = dma.done %s210, %s408
    %s410 = sshll.u32 %s399, 4
    %411 = dma.done %s258, %s410
    %s412 = sshll.u32 %s399, 4
    %413 = dma.done %s306, %s412
    %s414 = sshll.u32 %s399, 4
    %415 = dma.done %s354, %s414
    %v416 = vld [vmem:[%s2] sm:$0xff]
    %v417 = vld [vmem:[%s2 + $0x8] sm:$0xff]
    %v418 = vld [vmem:[%s2 + $0x10] sm:$0xff]
    %v419 = vld [vmem:[%s2 + $0x18] sm:$0xff]
    %v420 = vld [vmem:[%s2 + $0x20] sm:$0x1]
    %v421 = vld [vmem:[%s2 + $0x28] sm:$0xff]
    %v422 = vld [vmem:[%s2 + $0x30] sm:$0xff]
    %v423 = vld [vmem:[%s2 + $0x38] sm:$0xff]
    %v424 = vld [vmem:[%s2 + $0x40] sm:$0xff]
    %v425 = vld [vmem:[%s2 + $0x48] sm:$0x1]
    %v426 = vld [vmem:[#allocation2] sm:$0xff]
    %v427 = vlaneseq
    %v428 = vshrl.u32 %v427, 7
    %v429 = vsub.s32 0, %v428
    %v430 = vrot.slane %v420, %v429
    %vm431 = vcmask 261120
    %v433 = vsel %vm431, %v426, 0
    %435 = vmatprep.subr.mxu0 0.0
    %436 = vmatpush1.msra.mxu0 %v416
    %437 = vmatprep.subr.mxu0 0.0
    %438 = vmatpush1.msra.mxu0 %v417
    %439 = vmatprep.subr.mxu0 0.0
    %440 = vmatpush1.msra.mxu0 %v418
    %441 = vmatprep.subr.mxu0 0.0
    %442 = vmatpush1.msra.mxu0 %v419
    %443 = vmatprep.subr.mxu0 0.0
    %444 = vmatpush1.msra.mxu0 0.0
    %445 = vmatprep.subr.mxu0 0.0
    %446 = vmatpush1.msra.mxu0 0.0
    %447 = vmatprep.subr.mxu0 0.0
    %448 = vmatpush1.msra.mxu0 0.0
    %449 = vmatprep.subr.mxu0 0.0
    %450 = vmatpush1.msra.mxu0 0.0
    %451 = vmatprep.subr.mxu0 0.0
    %452 = vmatpush1.msra.mxu0 0.0
    %453 = vmatprep.subr.mxu0 0.0
    %454 = vmatpush1.msra.mxu0 0.0
    %455 = vmatprep.subr.mxu0 0.0
    %456 = vmatpush1.msra.mxu0 0.0
    %457 = vmatprep.subr.mxu0 0.0
    %458 = vmatpush1.msra.mxu0 0.0
    %459 = vmatprep.subr.mxu0 0.0
    %460 = vmatpush1.msra.mxu0 0.0
    %461 = vmatprep.subr.mxu0 0.0
    %462 = vmatpush1.msra.mxu0 0.0
    %463 = vmatprep.subr.mxu0 0.0
    %464 = vmatpush1.msra.mxu0 0.0
    %465 = vmatprep.subr.mxu0 0.0
    %466 = vmatpush1.msra.mxu0 0.0
    %467 = vmatprep.subr.mxu0 0.0
    %468 = vmatpush1.msra.mxu0 0.0
    %469 = vmatprep.subr.mxu0 0.0
    %470 = vmatpush1.msra.mxu0 0.0
    %471 = vmatprep.subr.mxu0 0.0
    %472 = vmatpush1.msra.mxu0 0.0
    %473 = vmatprep.subr.mxu0 0.0
    %474 = vmatpush1.msra.mxu0 0.0
    %475 = vmatprep.subr.mxu0 0.0
    %476 = vmatpush1.msra.mxu0 0.0
    %477 = vmatprep.subr.mxu0 0.0
    %478 = vmatpush1.msra.mxu0 0.0
    %479 = vmatprep.subr.mxu0 0.0
    %480 = vmatpush1.msra.mxu0 0.0
    %481 = vmatprep.subr.mxu0 0.0
    %482 = vmatpush1.msra.mxu0 0.0
    %483 = vmatprep.subr.mxu0 0.0
    %484 = vmatpush1.msra.mxu0 0.0
    %485 = vmatprep.subr.mxu0 0.0
    %486 = vmatpush1.msra.mxu0 0.0
    %487 = vmatprep.subr.mxu0 0.0
    %488 = vmatpush1.msra.mxu0 0.0
    %489 = vmatprep.subr.mxu0 0.0
    %490 = vmatpush1.msra.mxu0 0.0
    %491 = vmatprep.subr.mxu0 0.0
    %492 = vmatpush1.msra.mxu0 0.0
    %493 = vmatprep.subr.mxu0 0.0
    %494 = vmatpush1.msra.mxu0 0.0
    %495 = vmatprep.subr.mxu0 0.0
    %496 = vmatpush1.msra.mxu0 0.0
    %497 = vmatprep.subr.mxu0 0.0
    %498 = vmatpush1.msra.mxu0 0.0
    %499 = vmatprep.mubr.f32.mxu0 0.0
    %500 = vmatmul.mubr.f32.gmra.mrb[0].mxu0 %v433
    %v501 = vpop.f32.mrb[0].mxu0
    %v502 = vadd.f32 %v430, %v501
    %v503 = vpop.f32.mrb[0].mxu0
    %504 = vdwg.mxu0
    %v505 = vxor.u32 %v502, 2147483648
    %v506 = vmul.f32 %v505, 1.442695
    %v507 = vpow.pop %v506
    %v508 = vadd.f32 %v507, 1.0
    %v509 = vrcp.pop %v508
    %v510 = vmul.f32 1.0, %v509
    %v511 = vmul.f32 %v502, %v510
    %v512 = vlaneseq
    %v513 = vshrl.u32 %v512, 7
    %v514 = vsub.s32 0, %v513
    %v515 = vrot.slane %v425, %v514
    %v517 = vsel %vm431, %v511, 0
    %519 = vmatprep.subr.mxu0 0.0
    %520 = vmatpush1.msra.mxu0 %v421
    %521 = vmatprep.subr.mxu0 0.0
    %522 = vmatpush1.msra.mxu0 %v422
    %523 = vmatprep.subr.mxu0 0.0
    %524 = vmatpush1.msra.mxu0 %v423
    %525 = vmatprep.subr.mxu0 0.0
    %526 = vmatpush1.msra.mxu0 %v424
    %527 = vmatprep.subr.mxu0 0.0
    %528 = vmatpush1.msra.mxu0 0.0
    %529 = vmatprep.subr.mxu0 0.0
    %530 = vmatpush1.msra.mxu0 0.0
    %531 = vmatprep.subr.mxu0 0.0
    %532 = vmatpush1.msra.mxu0 0.0
    %533 = vmatprep.subr.mxu0 0.0
    %534 = vmatpush1.msra.mxu0 0.0
    %535 = vmatprep.subr.mxu0 0.0
    %536 = vmatpush1.msra.mxu0 0.0
    %537 = vmatprep.subr.mxu0 0.0
    %538 = vmatpush1.msra.mxu0 0.0
    %539 = vmatprep.subr.mxu0 0.0
    %540 = vmatpush1.msra.mxu0 0.0
    %541 = vmatprep.subr.mxu0 0.0
    %542 = vmatpush1.msra.mxu0 0.0
    %543 = vmatprep.subr.mxu0 0.0
    %544 = vmatpush1.msra.mxu0 0.0
    %545 = vmatprep.subr.mxu0 0.0
    %546 = vmatpush1.msra.mxu0 0.0
    %547 = vmatprep.subr.mxu0 0.0
    %548 = vmatpush1.msra.mxu0 0.0
    %549 = vmatprep.subr.mxu0 0.0
    %550 = vmatpush1.msra.mxu0 0.0
    %551 = vmatprep.subr.mxu0 0.0
    %552 = vmatpush1.msra.mxu0 0.0
    %553 = vmatprep.subr.mxu0 0.0
    %554 = vmatpush1.msra.mxu0 0.0
    %555 = vmatprep.subr.mxu0 0.0
    %556 = vmatpush1.msra.mxu0 0.0
    %557 = vmatprep.subr.mxu0 0.0
    %558 = vmatpush1.msra.mxu0 0.0
    %559 = vmatprep.subr.mxu0 0.0
    %560 = vmatpush1.msra.mxu0 0.0
    %561 = vmatprep.subr.mxu0 0.0
    %562 = vmatpush1.msra.mxu0 0.0
    %563 = vmatprep.subr.mxu0 0.0
    %564 = vmatpush1.msra.mxu0 0.0
    %565 = vmatprep.subr.mxu0 0.0
    %566 = vmatpush1.msra.mxu0 0.0
    %567 = vmatprep.subr.mxu0 0.0
    %568 = vmatpush1.msra.mxu0 0.0
    %569 = vmatprep.subr.mxu0 0.0
    %570 = vmatpush1.msra.mxu0 0.0
    %571 = vmatprep.subr.mxu0 0.0
    %572 = vmatpush1.msra.mxu0 0.0
    %573 = vmatprep.subr.mxu0 0.0
    %574 = vmatpush1.msra.mxu0 0.0
    %575 = vmatprep.subr.mxu0 0.0
    %576 = vmatpush1.msra.mxu0 0.0
    %577 = vmatprep.subr.mxu0 0.0
    %578 = vmatpush1.msra.mxu0 0.0
    %579 = vmatprep.subr.mxu0 0.0
    %580 = vmatpush1.msra.mxu0 0.0
    %581 = vmatprep.subr.mxu0 0.0
    %582 = vmatpush1.msra.mxu0 0.0
    %583 = vmatprep.mubr.f32.mxu0 0.0
    %584 = vmatmul.mubr.f32.gmra.mrb[0].mxu0 %v517
    %v585 = vpop.f32.mrb[0].mxu0
    %v586 = vadd.f32 %v515, %v585
    %v587 = vpop.f32.mrb[0].mxu0
    %588 = vdwg.mxu0
    %589 = vst.msk [vmem:[#allocation6] sm:$0xff] %vm431, %v586
    // Predicated region
    $region246: #{tpu_custom_call.1} parent=1 // pred_check
      _
    $region247: #{tpu_custom_call.1} parent=1 // pred_check_branch
      %591 = sbr.rel (0) target = $region249
    $region248: #{tpu_custom_call.1} parent=1 // pred_region
      %s593 = ssub.s32 128, 128
      %594 = vsyncadd [#allocation7], %s593
      %s596 = sshll.u32 [#allocation6], 4
      %s597 = int_to_ptr.vmem [resolvable:$true] %s596
      %599 = dma.vmem_to_hbm [thread:$0]  %s597, 128, %s3, [#allocation7]
    $region249: #{tpu_custom_call.1} parent=1 // pred_fallthru
      _
    // Predicated region
    $region250: #{tpu_custom_call.1} parent=1 // pred_check
      _
    $region251: #{tpu_custom_call.1} parent=1 // pred_check_branch
      %601 = sbr.rel (0) target = $region253
    $region252: #{tpu_custom_call.1} parent=1 // pred_region
      %602 = dma.done [#allocation7], 128
    $region253: #{tpu_custom_call.1} parent=1 // pred_fallthru
      _
    %603 = vsyncpa [#allocation7], 1
  %604 = vsyncmov [#allocation3]
  %s605 = vpop.sfrf %604
  %p606 = scmp.eq.s32.totalorder %s605, 0
  %p607 = pneg %p606
  %609 = shalt.err (%p607)
  %s610 = scalar_lea.sflag [#allocation3], 1
  %611 = vsyncmov %s610
  %s612 = vpop.sfrf %611
  %p613 = scmp.eq.s32.totalorder %s612, 0
  %p614 = pneg %p613
  %616 = shalt.err (%p614)
  %s617 = scalar_lea.sflag [#allocation3], 2
  %618 = vsyncmov %s617
  %s619 = vpop.sfrf %618
  %p620 = scmp.eq.s32.totalorder %s619, 0
  %p621 = pneg %p620
  %623 = shalt.err (%p621)
  %s624 = scalar_lea.sflag [#allocation3], 3
  %625 = vsyncmov %s624
  %s626 = vpop.sfrf %625
  %p627 = scmp.eq.s32.totalorder %s626, 0
  %p628 = pneg %p627
  %630 = shalt.err (%p628)
  %s631 = scalar_lea.sflag [#allocation3], 4
  %632 = vsyncmov %s631
  %s633 = vpop.sfrf %632
  %p634 = scmp.eq.s32.totalorder %s633, 0
  %p635 = pneg %p634
  %637 = shalt.err (%p635)
  %s638 = scalar_lea.sflag [#allocation3], 5
  %639 = vsyncmov %s638
  %s640 = vpop.sfrf %639
  %p641 = scmp.eq.s32.totalorder %s640, 0
  %p642 = pneg %p641
  %644 = shalt.err (%p642)
  %s645 = scalar_lea.sflag [#allocation3], 6
  %646 = vsyncmov %s645
  %s647 = vpop.sfrf %646
  %p648 = scmp.eq.s32.totalorder %s647, 0
  %p649 = pneg %p648
  %651 = shalt.err (%p649)
  %s652 = scalar_lea.sflag [#allocation3], 7
  %653 = vsyncmov %s652
  %s654 = vpop.sfrf %653
  %p655 = scmp.eq.s32.totalorder %s654, 0
  %p656 = pneg %p655
  %658 = shalt.err (%p656)

</llo_original>
